<compile_context>
chip_gen: v7x
topology: tpu7x:2x2x1
jax: 0.10.0
libtpu: 0.0.40
codegen_flags: <defaults>
</compile_context>

<pallas_src>
import functools

import jax
import jax.numpy as jnp
from jax.experimental import pallas as pl
from jax.experimental.pallas import tpu as pltpu


# ----------------------------------------------------------------------------
# Small shape helpers
# ----------------------------------------------------------------------------
def _round_up(x, m):
    return ((x + m - 1) // m) * m


def _dst_tiling(n_dst, pref=256):
    """(tile_m, n_dst_padded): tile_m multiple of 8 (sublane) or the full padded dim."""
    n8 = _round_up(n_dst, 8)
    if n8 <= pref:
        return n8, n8
    return pref, _round_up(n_dst, pref)


def _src_tiling(n_src, pref=512):
    """(tile_k, n_src_padded): tile_k multiple of 128 (lane) or the full padded dim."""
    n128 = _round_up(n_src, 128)
    if n128 <= pref:
        return n128, n128
    return pref, _round_up(n_src, pref)


def _row_tile(n_pad, pref=256):
    return pref if n_pad % pref == 0 else n_pad


# ----------------------------------------------------------------------------
# Pallas kernels
# ----------------------------------------------------------------------------
def _proj_kernel(x_ref, w_ref, o_ref):
    # Z_rel = X_src @ W_rel  (bf16 in, f32 accumulate on the MXU, bf16 out)
    o_ref[...] = jnp.dot(x_ref[...], w_ref[...],
                         preferred_element_type=jnp.float32).astype(o_ref.dtype)


def project_stack(x_stack, w_stack, *, tp):
    """Batched per-relation projection: (R, Ns, Fi) x (R, Fi, Fo) -> (R, Ns, Fo) bf16."""
    r, n_pad, f_in_pad = x_stack.shape
    f_out_pad = w_stack.shape[2]
    return pl.pallas_call(
        _proj_kernel,
        out_shape=jax.ShapeDtypeStruct((r, n_pad, f_out_pad), jnp.bfloat16),
        grid=(r, n_pad // tp),
        in_specs=[
            pl.BlockSpec((None, tp, f_in_pad), lambda rr, i: (rr, i, 0)),
            pl.BlockSpec((None, f_in_pad, f_out_pad), lambda rr, i: (rr, 0, 0)),
        ],
        out_specs=pl.BlockSpec((None, tp, f_out_pad), lambda rr, i: (rr, i, 0)),
        compiler_params=pltpu.CompilerParams(
            dimension_semantics=("parallel", "parallel")),
    )(x_stack, w_stack)


def _rel_agg_kernel(at_ref, z_ref, bsum_ref, o_ref, acc_ref, *, apply_relu):
    """Fused: H_dst_tile = [relu]( sum_rel A_hat^T_rel @ Z_rel + sum_rel b_rel )."""
    r = pl.program_id(1)
    k = pl.program_id(2)

    @pl.when((r == 0) & (k == 0))
    def _init():
        acc_ref[...] = jnp.zeros_like(acc_ref)

    acc_ref[...] += jnp.dot(at_ref[...], z_ref[...],
                            preferred_element_type=jnp.float32)

    @pl.when((r == pl.num_programs(1) - 1) & (k == pl.num_programs(2) - 1))
    def _finalize():
        out = acc_ref[...] + bsum_ref[...]
        if apply_relu:
            out = jnp.maximum(out, 0.0)
        o_ref[...] = out.astype(o_ref.dtype)


def rel_sum_graphconv(a_t_stack, z_stack, bias_sum, *, tm, tk, apply_relu):
    """One fused HeteroGraphConv(dst type): all relations + sum + bias (+ReLU)."""
    r, n_dst_pad, n_src_pad = a_t_stack.shape
    f_pad = z_stack.shape[2]
    grid = (n_dst_pad // tm, r, n_src_pad // tk)
    return pl.pallas_call(
        functools.partial(_rel_agg_kernel, apply_relu=apply_relu),
        out_shape=jax.ShapeDtypeStruct((n_dst_pad, f_pad), jnp.float32),
        grid=grid,
        in_specs=[
            pl.BlockSpec((None, tm, tk), lambda i, rr, kk: (rr, i, kk)),
            pl.BlockSpec((None, tk, f_pad), lambda i, rr, kk: (rr, kk, 0)),
            pl.BlockSpec((1, f_pad), lambda i, rr, kk: (0, 0)),
        ],
        out_specs=pl.BlockSpec((tm, f_pad), lambda i, rr, kk: (i, 0)),
        scratch_shapes=[pltpu.VMEM((tm, f_pad), jnp.float32)],
        compiler_params=pltpu.CompilerParams(
            dimension_semantics=("parallel", "arbitrary", "arbitrary")),
    )(a_t_stack, z_stack, bias_sum)


# ----------------------------------------------------------------------------
# Graph preprocessing (normalization, padding, per-dst grouping) — done once
# ----------------------------------------------------------------------------
def normalized_adj_t(a):
    """DGL GraphConv norm='both': A_hat = D_src^{-1/2} A D_dst^{-1/2}; zero-degree -> 0."""
    a = a.astype(jnp.float32)
    deg_src = jnp.sum(a, axis=1)
    deg_dst = jnp.sum(a, axis=0)
    ns = jnp.where(deg_src > 0, jax.lax.rsqrt(jnp.maximum(deg_src, 1e-12)), 0.0)
    nd = jnp.where(deg_dst > 0, jax.lax.rsqrt(jnp.maximum(deg_dst, 1e-12)), 0.0)
    return (ns[:, None] * a * nd[None, :]).T  # (N_dst, N_src)


def build_graph(adjs, rel_names):
    """Group relations by dst type; normalize, zero-pad and stack A_hat^T once
    (reused by all three layers)."""
    groups = {}
    for stype, etype, dtype_ in rel_names:
        groups.setdefault(dtype_, []).append((stype, etype))
    graph = {}
    for dtype_, rels in groups.items():
        n_dst = adjs[rels[0][1]].shape[1]
        tm, n_dst_pad = _dst_tiling(n_dst)
        n_src_max = max(adjs[e].shape[0] for _, e in rels)
        tk, n_src_pad = _src_tiling(n_src_max)
        a_stack = []
        for _, etype in rels:
            a_t = normalized_adj_t(adjs[etype])  # (n_dst, n_src)
            a_stack.append(jnp.pad(a_t, ((0, n_dst_pad - a_t.shape[0]),
                                         (0, n_src_pad - a_t.shape[1]))))
        # TODO(synk): for realistically sparse graphs, also emit a per-(tm,tk) nonzero-block
        # table here and drive the K axis via PrefetchScalarGridSpec (block-sparse skipping).
        graph[dtype_] = dict(
            rels=rels,
            a_t=jnp.stack(a_stack, 0).astype(jnp.bfloat16),  # (R, n_dst_pad, n_src_pad)
            n_dst=n_dst, n_dst_pad=n_dst_pad, tm=tm,
            n_src_pad=n_src_pad, tk=tk,
        )
    return graph


# ----------------------------------------------------------------------------
# Model glue
# ----------------------------------------------------------------------------
def hetero_layer(graph, h, layer_params, apply_relu):
    """One dglnn.HeteroGraphConv(aggregate='sum') layer (+ fused ReLU)."""
    out = {}
    for dtype_, g in graph.items():
        rels = g["rels"]
        f_out = layer_params[rels[0][1]][0].shape[1]
        f_out_pad = _round_up(f_out, 128)
        f_in_pad = max(_round_up(layer_params[e][0].shape[0], 128) for _, e in rels)

        x_list, w_list = [], []
        b_sum = jnp.zeros((1, f_out_pad), jnp.float32)
        for stype, etype in rels:
            w, b = layer_params[etype]
            x = h[stype]
            x_list.append(jnp.pad(x, ((0, g["n_src_pad"] - x.shape[0]),
                                      (0, f_in_pad - x.shape[1]))))
            w_list.append(jnp.pad(w, ((0, f_in_pad - w.shape[0]),
                                      (0, f_out_pad - w.shape[1]))))
            b_sum = b_sum + jnp.pad(b, ((0, 0), (0, f_out_pad - b.shape[1])))
        x_stack = jnp.stack(x_list, 0).astype(jnp.bfloat16)   # (R, n_src_pad, f_in_pad)
        w_stack = jnp.stack(w_list, 0).astype(jnp.bfloat16)   # (R, f_in_pad, f_out_pad)

        # Hoisted per-relation projection (one batched pallas_call).
        z_stack = project_stack(x_stack, w_stack, tp=_row_tile(g["n_src_pad"]))

        # Fused message passing + relation sum + bias (+ ReLU).
        y = rel_sum_graphconv(g["a_t"], z_stack, b_sum,
                              tm=g["tm"], tk=g["tk"], apply_relu=apply_relu)
        out[dtype_] = y[: g["n_dst"], :f_out]
    return out


def model_forward(graph, x, params):
    h = hetero_layer(graph, x, params["conv1"], apply_relu=True)
    # TODO(synk): F.dropout(p=0.2) modeled in eval mode (identity); training-mode dropout omitted.
    h = hetero_layer(graph, h, params["conv2"], apply_relu=True)
    h = hetero_layer(graph, h, params["conv3"], apply_relu=False)
    return h


def init_params(key, rel_names, in_feats, hid_feats, out_feats):
    """Deterministic Xavier-uniform-style init for every GraphConv (W, b)."""
    params = {"conv1": {}, "conv2": {}, "conv3": {}}
    dims = {
        "conv1": lambda stype: (in_feats[stype], hid_feats),
        "conv2": lambda stype: (hid_feats, hid_feats),
        "conv3": lambda stype: (hid_feats, out_feats),
    }
    for layer in ("conv1", "conv2", "conv3"):
        for stype, etype, _dtype in rel_names:
            fin, fout = dims[layer](stype)
            key, kw = jax.random.split(key)
            bound = (6.0 / (fin + fout)) ** 0.5
            w = jax.random.uniform(kw, (fin, fout), jnp.float32, -bound, bound)
            b = jnp.zeros((1, fout), jnp.float32)
            params[layer][etype] = (w, b)
    return params


def reference_forward(adjs, rel_names, x, params):
    """Pure-JAX f32 reference of the same forward pass (sanity check only)."""
    def layer(h, lp, relu):
        out = {}
        for stype, etype, dtype_ in rel_names:
            w, b = lp[etype]
            y = normalized_adj_t(adjs[etype]) @ (h[stype] @ w) + b
            out[dtype_] = out.get(dtype_, 0.0) + y
        return {k: (jnp.maximum(v, 0.0) if relu else v) for k, v in out.items()}
    h = layer(x, params["conv1"], True)
    h = layer(h, params["conv2"], True)
    h = layer(h, params["conv3"], False)
    return h


# ----------------------------------------------------------------------------
if __name__ == "__main__":
    key = jax.random.PRNGKey(0)

    # Small heterogeneous graph: two node types, three relations.
    num_nodes = {"a": 16, "b": 24}
    in_feats = {"a": 12, "b": 20}
    hid_feats = 32
    out_feats = 8
    rel_names = [("a", "r_aa", "a"), ("a", "r_ab", "b"), ("b", "r_ba", "a")]

    # Deterministic random dense adjacencies (N_src, N_dst).
    key, k1, k2, k3 = jax.random.split(key, 4)
    adjs = {
        "r_aa": jax.random.bernoulli(k1, 0.3, (num_nodes["a"], num_nodes["a"])).astype(jnp.float32),
        "r_ab": jax.random.bernoulli(k2, 0.3, (num_nodes["a"], num_nodes["b"])).astype(jnp.float32),
        "r_ba": jax.random.bernoulli(k3, 0.3, (num_nodes["b"], num_nodes["a"])).astype(jnp.float32),
    }

    # Deterministic node features.
    key, kxa, kxb = jax.random.split(key, 3)
    x = {
        "a": jax.random.normal(kxa, (num_nodes["a"], in_feats["a"]), jnp.float32),
        "b": jax.random.normal(kxb, (num_nodes["b"], in_feats["b"]), jnp.float32),
    }

    # Deterministic parameters (synthetic, no checkpoint).
    key, kp = jax.random.split(key)
    params = init_params(kp, rel_names, in_feats, hid_feats, out_feats)

    graph = build_graph(adjs, rel_names)
    h = model_forward(graph, x, params)
    jax.block_until_ready(h)

    assert h["a"].shape == (num_nodes["a"], out_feats)
    assert h["b"].shape == (num_nodes["b"], out_feats)

    # Loose numerical sanity check vs pure-JAX f32 reference (kernels use bf16 inputs).
    ref = reference_forward(adjs, rel_names, x, params)
    for nt in ("a", "b"):
        err = float(jnp.max(jnp.abs(h[nt] - ref[nt])))
        scale = float(jnp.max(jnp.abs(ref[nt]))) + 1e-6
        assert err <= 0.1 * scale + 0.1, (nt, err, scale)

    print("KERNEL_OK")
</pallas_src>

<mosaic_0001>
module attributes {stable_mosaic.version = 11 : i64} {
  func.func @_proj_kernel(%arg0: i32, %arg1: i32, %arg2: memref<1x128x128xbf16, #tpu.memory_space<vmem>>, %arg3: memref<1x128x128xbf16, #tpu.memory_space<vmem>>, %arg4: memref<1x128x128xbf16, #tpu.memory_space<vmem>>) attributes {dimension_semantics = [#tpu.dimension_semantics<parallel>, #tpu.dimension_semantics<parallel>], iteration_bounds = array<i64: 2, 1>, scalar_prefetch = 0 : i64, scratch_operands = 0 : i64, tpu.core_type = #tpu.core_type<tc>, window_params = [{transform_indices = @transform_0, window_bounds = array<i64: 1, 128, 128>}, {transform_indices = @transform_1, window_bounds = array<i64: 1, 128, 128>}, {transform_indices = @transform_2, window_bounds = array<i64: 1, 128, 128>}]} {
    %c0 = arith.constant 0 : index
    %c0_0 = arith.constant 0 : index
    %c0_1 = arith.constant 0 : index
    %0 = vector.load %arg2[%c0, %c0_0, %c0_1] : memref<1x128x128xbf16, #tpu.memory_space<vmem>>, vector<1x128x128xbf16>
    %1 = vector.shape_cast %0 : vector<1x128x128xbf16> to vector<128x128xbf16>
    %c0_2 = arith.constant 0 : index
    %c0_3 = arith.constant 0 : index
    %c0_4 = arith.constant 0 : index
    %2 = vector.load %arg3[%c0_2, %c0_3, %c0_4] : memref<1x128x128xbf16, #tpu.memory_space<vmem>>, vector<1x128x128xbf16>
    %3 = vector.shape_cast %2 : vector<1x128x128xbf16> to vector<128x128xbf16>
    %cst = arith.constant dense<0.000000e+00> : vector<128x128xf32>
    %4 = tpu.matmul %1, %3, %cst {dimension_numbers = #tpu.dot_dimension_numbers<[1], [0], [0], [1], [0, 0, 1, 1], [], []>} : vector<128x128xbf16>, vector<128x128xbf16>, vector<128x128xf32> -> vector<128x128xf32>
    %5 = arith.truncf %4 : vector<128x128xf32> to vector<128x128xbf16>
    %c0_5 = arith.constant 0 : index
    %c0_6 = arith.constant 0 : index
    %c0_7 = arith.constant 0 : index
    %6 = vector.load %arg4[%c0_5, %c0_6, %c0_7] : memref<1x128x128xbf16, #tpu.memory_space<vmem>>, vector<1x128x128xbf16>
    %7 = vector.shape_cast %6 : vector<1x128x128xbf16> to vector<128x128xbf16>
    %8 = vector.shape_cast %5 : vector<128x128xbf16> to vector<1x128x128xbf16>
    tpu.vector_store %arg4[%c0_5, %c0_6, %c0_7], %8 {strides = array<i32>} : memref<1x128x128xbf16, #tpu.memory_space<vmem>>, vector<1x128x128xbf16>,
    return
  }
  func.func @transform_0(%arg0: i32, %arg1: i32) -> (i32, i32, i32) {
    %c0_i32 = arith.constant 0 : i32
    %c0_i32_0 = arith.constant 0 : i32
    return %arg0, %arg1, %c0_i32 : i32, i32, i32
  }
  func.func @transform_1(%arg0: i32, %arg1: i32) -> (i32, i32, i32) {
    %c0_i32 = arith.constant 0 : i32
    %c0_i32_0 = arith.constant 0 : i32
    %c0_i32_1 = arith.constant 0 : i32
    return %arg0, %c0_i32, %c0_i32_0 : i32, i32, i32
  }
  func.func @transform_2(%arg0: i32, %arg1: i32) -> (i32, i32, i32) {
    %c0_i32 = arith.constant 0 : i32
    %c0_i32_0 = arith.constant 0 : i32
    return %arg0, %arg1, %c0_i32 : i32, i32, i32
  }
}

</mosaic_0001>

<llo_original>
// kernel: tpu_custom_call.1
$region0: #{tpu_custom_call.1}
  #allocation0 [shape = 'u32[]', space=smem, size = 0x4, offset = 0x4, fixed_abs, tag = 'smem constant byte address 0x4 - core index']
  #allocation1 [shape = 'u32[144,128]{1,0:T(1,128)}', space=vmem, size = 0x12000, scoped, tag = 'internal scratch']
  %s0 = inlined_call_operand.hbm [shape: bf16[2,128,128], index: 0, kind: input, shape index: {}]
  %s1 = inlined_call_operand.hbm [shape: bf16[2,128,128], index: 1, kind: input, shape index: {}]
  %s2 = inlined_call_operand.hbm [shape: bf16[2,128,128], index: 2, kind: output, shape index: {}]
  %s3 = sld [smem:[#allocation0]]
  $region49: #{tpu_custom_call.1} parent=0
    _
  %s5 = ssub.s32 1, %s3
  %s6 = scalar_select 0, %s5, %s3
  $region1: #{tpu_custom_call.1} parent=0
    #allocation2 [shape = 'u8[65536]{0}', space=vmem, size = 0x10000, scoped, tag = 'input window, operand 0']
    #allocation3 [shape = 's32[2]{0}', space=sflag, size = 0x8, scoped, tag = 'scoped memory for tpu_custom_call.1']
    #allocation4 [shape = 's32[2]{0}', space=sflag, size = 0x8, scoped, tag = 'scoped memory for tpu_custom_call.1']
    #allocation5 [shape = 'u8[65536]{0}', space=vmem, size = 0x10000, scoped, tag = 'input window, operand 1']
    #allocation6 [shape = 's32[2]{0}', space=sflag, size = 0x8, scoped, tag = 'scoped memory for tpu_custom_call.1']
    #allocation7 [shape = 'u8[65536]{0}', space=vmem, size = 0x10000, scoped, tag = 'output window, operand 0']
    %7 = vsyncpa [#allocation3], 0
    %s8 = scalar_lea.sflag [#allocation3], 1
    %9 = vsyncpa %s8, 0
    %10 = vsyncpa [#allocation6], 0
    %s11 = scalar_lea.sflag [#allocation6], 1
    %12 = vsyncpa %s11, 0
    %13 = vsyncpa [#allocation4], 0
    %s14 = scalar_lea.sflag [#allocation4], 1
    %15 = vsyncpa %s14, 0
    loop: start=0, step=1, limit=4
    $region2: #{tpu_custom_call.1} parent=1 // loop_pre_header
      _
    $region3: #{tpu_custom_call.1} parent=1 // loop_header
      %s17 = sphi 0, %s21
      %p18 = scmp.ge.s32.totalorder %s17, 4
      %s24 = sphi 0, %s36
      %s25 = sphi 0, %s32
      %s26 = sphi 0, %s24
      %s27 = sphi 0, %s25
      %s28 = sphi 0, %s26
      %s29 = sphi 0, %s27
      %s41 = sphi 0, %s43
      %s44 = sphi 0, %s41
      %s45 = sphi 0, %s44
      %s61 = sphi 0, %s45
      %s67 = sphi 0, %s69
      %s70 = sphi 0, %s67
      %s71 = sphi 0, %s70
      %s87 = sphi 0, %s71
      %s95 = sphi 0, %s97
      %s98 = sphi 0, %s95
      %s99 = sphi 0, %s98
      %s115 = sphi 0, %s99
    $region4: #{tpu_custom_call.1} parent=1 // loop_header_branch
      %20 = sbr.rel (%p18) target = $region8
    $region5: #{tpu_custom_call.1} parent=1 // loop_body
      %s22 = ssub.s32 %s17, 1
      %s23 = ssub.s32 %s17, 2
      %s30 = sadd.s32 1, %s25
      %p31 = scmp.ge.s32.totalorder %s30, 1
      %s32 = scalar_select %p31, 0, %s30
      %s33 = sadd.s32 1, %s24
      %s34 = scalar_select %p31, %s33, %s24
      %p35 = scmp.ge.s32.totalorder %s34, 2
      %s36 = scalar_select %p35, 0, %s34
      %s37 = ssub.s32 %s24, %s36
      %s38 = ssub.s32 %s25, %s32
      %s39 = sor.u32 %s37, %s38
      %p40 = scmp.eq.s32.totalorder %s39, 0
      %s42 = sadd.s32 %s41, 1
      %s43 = scalar_select %p40, %s41, %s42
      %p46 = pneg %p40
      %p47 = scmp.eq.s32.totalorder %s17, 1
      %p48 = por %p46, %p47
      %p49 = scmp.ne.s32.totalorder %s41, %s44
      %p50 = scmp.eq.s32.totalorder %s17, 0
      %p51 = por %p49, %p50
      %p52 = scmp.ne.s32.totalorder %s41, %s44
      %p53 = scmp.eq.s32.totalorder %s22, 1
      %p54 = por %p52, %p53
      %p55 = scmp.ne.s32.totalorder %s44, %s45
      %p56 = scmp.eq.s32.totalorder %s22, 0
      %p57 = por %p55, %p56
      %p58 = scmp.ne.s32.totalorder %s44, %s45
      %p59 = scmp.eq.s32.totalorder %s23, 1
      %p60 = por %p58, %p59
      %p62 = scmp.ne.s32.totalorder %s45, %s61
      %p63 = scmp.eq.s32.totalorder %s23, 0
      %p64 = por %p62, %p63
      %s65 = ssub.s32 %s24, %s36
      %p66 = scmp.eq.s32.totalorder %s65, 0
      %s68 = sadd.s32 %s67, 1
      %s69 = scalar_select %p66, %s67, %s68
      %p72 = pneg %p66
      %p73 = scmp.eq.s32.totalorder %s17, 1
      %p74 = por %p72, %p73
      %p75 = scmp.ne.s32.totalorder %s67, %s70
      %p76 = scmp.eq.s32.totalorder %s17, 0
      %p77 = por %p75, %p76
      %p78 = scmp.ne.s32.totalorder %s67, %s70
      %p79 = scmp.eq.s32.totalorder %s22, 1
      %p80 = por %p78, %p79
      %p81 = scmp.ne.s32.totalorder %s70, %s71
      %p82 = scmp.eq.s32.totalorder %s22, 0
      %p83 = por %p81, %p82
      %p84 = scmp.ne.s32.totalorder %s70, %s71
      %p85 = scmp.eq.s32.totalorder %s23, 1
      %p86 = por %p84, %p85
      %p88 = scmp.ne.s32.totalorder %s71, %s87
      %p89 = scmp.eq.s32.totalorder %s23, 0
      %p90 = por %p88, %p89
      %s91 = ssub.s32 %s24, %s36
      %s92 = ssub.s32 %s25, %s32
      %s93 = sor.u32 %s91, %s92
      %p94 = scmp.eq.s32.totalorder %s93, 0
      %s96 = sadd.s32 %s95, 1
      %s97 = scalar_select %p94, %s95, %s96
      %p100 = pneg %p94
      %p101 = scmp.eq.s32.totalorder %s17, 1
      %p102 = por %p100, %p101
      %p103 = scmp.ne.s32.totalorder %s95, %s98
      %p104 = scmp.eq.s32.totalorder %s17, 0
      %p105 = por %p103, %p104
      %p106 = scmp.ne.s32.totalorder %s95, %s98
      %p107 = scmp.eq.s32.totalorder %s22, 1
      %p108 = por %p106, %p107
      %p109 = scmp.ne.s32.totalorder %s98, %s99
      %p110 = scmp.eq.s32.totalorder %s22, 0
      %p111 = por %p109, %p110
      %p112 = scmp.ne.s32.totalorder %s98, %s99
      %p113 = scmp.eq.s32.totalorder %s23, 1
      %p114 = por %p112, %p113
      %p116 = scmp.ne.s32.totalorder %s99, %s115
      %p117 = scmp.eq.s32.totalorder %s23, 0
      %p118 = por %p116, %p117
      %p119 = scmp.le.s32.totalorder 1, %s17
      %p120 = scmp.lt.s32.totalorder %s17, 3
      %p121 = pnand %p119, %p120
      %p122 = pneg %p121
      // Predicated region
      $region9: #{tpu_custom_call.1} parent=5 // pred_check
        _
      $region10: #{tpu_custom_call.1} parent=5 // pred_check_branch
        %124 = sbr.rel (%p121) target = $region12
      $region11: #{tpu_custom_call.1} parent=5 // pred_region
        %s125 = ssub.s32 %s17, 1
      $region12: #{tpu_custom_call.1} parent=5 // pred_fallthru
        _
      %p126 = scmp.lt.s32.totalorder %s17, 2
      // Predicated region
      $region13: #{tpu_custom_call.1} parent=5 // pred_check
        %p127 = pneg %p126
      $region14: #{tpu_custom_call.1} parent=5 // pred_check_branch
        %129 = sbr.rel (%p127) target = $region16
      $region15: #{tpu_custom_call.1} parent=5 // pred_region
        // Predicated region
        $region17: #{tpu_custom_call.1} parent=15 // pred_check
          %p130 = pneg %p51
        $region18: #{tpu_custom_call.1} parent=15 // pred_check_branch
          %132 = sbr.rel (%p130) target = $region20
        $region19: #{tpu_custom_call.1} parent=15 // pred_region
          %s133 = sand.u32 %s41, 1
          %s134 = scalar_lea.sflag [#allocation3], %s133
          %s135 = sand.u32 %s41, 1
          %s136 = smul.addr %s135, 64
          %s137 = scalar_lea.vmem [#allocation2], %s136
          %s138 = smul.u32 16, %s25
          %s140 = ssub.s32 1024, 1024
          %141 = vsyncadd %s134, %s140
          %s142 = smul.addr %s24, 16
          %s143 = sadd.s32 %s138, %s142
          %s144 = smul.addr %s143, 64
          %s145 = scalar_lea.hbm %s0, %s144
          %s146 = sshll.u32 %s137, 4
          %s147 = int_to_ptr.vmem [resolvable:$true] %s146
          %152 = dma.hbm_to_vmem [thread:$0]  %s145, 1024, %s147, %s134, 64, 64, 4
        $region20: #{tpu_custom_call.1} parent=15 // pred_fallthru
          _
        // Predicated region
        $region21: #{tpu_custom_call.1} parent=15 // pred_check
          %p153 = pneg %p77
        $region22: #{tpu_custom_call.1} parent=15 // pred_check_branch
          %155 = sbr.rel (%p153) target = $region24
        $region23: #{tpu_custom_call.1} parent=15 // pred_region
          %s156 = sand.u32 %s67, 1
          %s157 = scalar_lea.sflag [#allocation6], %s156
          %s158 = sand.u32 %s67, 1
          %s159 = smul.addr %s158, 64
          %s160 = scalar_lea.vmem [#allocation5], %s159
          %s162 = ssub.s32 1024, 1024
          %163 = vsyncadd %s157, %s162
          %s164 = smul.addr %s24, 16
          %s165 = smul.addr %s164, 64
          %s166 = scalar_lea.hbm %s1, %s165
          %s167 = sshll.u32 %s160, 4
          %s168 = int_to_ptr.vmem [resolvable:$true] %s167
          %173 = dma.hbm_to_vmem [thread:$0]  %s166, 1024, %s168, %s157, 64, 64, 4
        $region24: #{tpu_custom_call.1} parent=15 // pred_fallthru
          _
      $region16: #{tpu_custom_call.1} parent=5 // pred_fallthru
        _
      %p174 = scmp.le.s32.totalorder 1, %s17
      %p175 = scmp.lt.s32.totalorder %s17, 3
      %p176 = pnand %p174, %p175
      %p177 = pneg %p176
      // Predicated region
      $region25: #{tpu_custom_call.1} parent=5 // pred_check
        _
      $region26: #{tpu_custom_call.1} parent=5 // pred_check_branch
        %179 = sbr.rel (%p176) target = $region28
      $region27: #{tpu_custom_call.1} parent=5 // pred_region
        %s180 = ssub.s32 %s17, 1
        %s181 = sand.u32 %s44, 1
        %s182 = scalar_lea.sflag [#allocation3], %s181
        %s183 = sand.u32 %s44, 1
        %s184 = smul.addr %s183, 64
        %s185 = scalar_lea.vmem [#allocation2], %s184
        // Predicated region
        $region29: #{tpu_custom_call.1} parent=27 // pred_check
          %p186 = pneg %p57
        $region30: #{tpu_custom_call.1} parent=27 // pred_check_branch
          %188 = sbr.rel (%p186) target = $region32
        $region31: #{tpu_custom_call.1} parent=27 // pred_region
          %189 = dma.done %s182, 1024
        $region32: #{tpu_custom_call.1} parent=27 // pred_fallthru
          _
        %s190 = sand.u32 %s70, 1
        %s191 = scalar_lea.sflag [#allocation6], %s190
        %s192 = sand.u32 %s70, 1
        %s193 = smul.addr %s192, 64
        %s194 = scalar_lea.vmem [#allocation5], %s193
        // Predicated region
        $region33: #{tpu_custom_call.1} parent=27 // pred_check
          %p195 = pneg %p83
        $region34: #{tpu_custom_call.1} parent=27 // pred_check_branch
          %197 = sbr.rel (%p195) target = $region36
        $region35: #{tpu_custom_call.1} parent=27 // pred_region
          %198 = dma.done %s191, 1024
        $region36: #{tpu_custom_call.1} parent=27 // pred_fallthru
          _
        %s199 = sand.u32 %s44, 1
        %s200 = scalar_lea.sflag [#allocation3], %s199
        %s201 = sand.u32 %s44, 1
        %s202 = smul.addr %s201, 64
        %s203 = scalar_lea.vmem [#allocation2], %s202
        %p204 = pneg %p57
        %p205 = pneg %p54
        %s206 = sand.u32 %s70, 1
        %s207 = scalar_lea.sflag [#allocation6], %s206
        %s208 = sand.u32 %s70, 1
        %s209 = smul.addr %s208, 64
        %s210 = scalar_lea.vmem [#allocation5], %s209
        %p211 = pneg %p83
        %p212 = pneg %p80
        %p213 = pneg %p111
        %p214 = pneg %p108
        %s215 = sand.u32 %s98, 1
        %s216 = scalar_lea.sflag [#allocation4], %s215
        %s217 = sand.u32 %s98, 1
        %s218 = smul.addr %s217, 64
        %s219 = scalar_lea.vmem [#allocation7], %s218
        %s220 = smul.u32 16, %s27
        %s221 = smul.u32 16, %s27
        %v223 = vld [vmem:[%s185] sm:$0xf]
        %v224 = vld [vmem:[%s185 + $0x4] sm:$0xf]
        %v225 = vld [vmem:[%s185 + $0x8] sm:$0xf]
        %v226 = vld [vmem:[%s185 + $0xc] sm:$0xf]
        %v227 = vld [vmem:[%s185 + $0x10] sm:$0xf]
        %v228 = vld [vmem:[%s185 + $0x14] sm:$0xf]
        %v229 = vld [vmem:[%s185 + $0x18] sm:$0xf]
        %v230 = vld [vmem:[%s185 + $0x1c] sm:$0xf]
        %v231 = vld [vmem:[%s185 + $0x20] sm:$0xf]
        %v232 = vld [vmem:[%s185 + $0x24] sm:$0xf]
        %v233 = vld [vmem:[%s185 + $0x28] sm:$0xf]
        %v234 = vld [vmem:[%s185 + $0x2c] sm:$0xf]
        %v235 = vld [vmem:[%s185 + $0x30] sm:$0xf]
        %v236 = vld [vmem:[%s185 + $0x34] sm:$0xf]
        %v237 = vld [vmem:[%s185 + $0x38] sm:$0xf]
        %v238 = vld [vmem:[%s185 + $0x3c] sm:$0xf]
        %v239 = vld [vmem:[%s194] sm:$0xf]
        %v240 = vld [vmem:[%s194 + $0x4] sm:$0xf]
        %v241 = vld [vmem:[%s194 + $0x8] sm:$0xf]
        %v242 = vld [vmem:[%s194 + $0xc] sm:$0xf]
        %v243 = vld [vmem:[%s194 + $0x10] sm:$0xf]
        %v244 = vld [vmem:[%s194 + $0x14] sm:$0xf]
        %v245 = vld [vmem:[%s194 + $0x18] sm:$0xf]
        %v246 = vld [vmem:[%s194 + $0x1c] sm:$0xf]
        %v247 = vld [vmem:[%s194 + $0x20] sm:$0xf]
        %v248 = vld [vmem:[%s194 + $0x24] sm:$0xf]
        %v249 = vld [vmem:[%s194 + $0x28] sm:$0xf]
        %v250 = vld [vmem:[%s194 + $0x2c] sm:$0xf]
        %v251 = vld [vmem:[%s194 + $0x30] sm:$0xf]
        %v252 = vld [vmem:[%s194 + $0x34] sm:$0xf]
        %v253 = vld [vmem:[%s194 + $0x38] sm:$0xf]
        %v254 = vld [vmem:[%s194 + $0x3c] sm:$0xf]
        %v271 = vunpack.c.l.b16 %v223
        %v272 = vunpack.c.l.b16 %v224
        %v273 = vunpack.c.l.b16 %v225
        %v274 = vunpack.c.l.b16 %v226
        %v275 = vunpack.c.l.b16 %v227
        %v276 = vunpack.c.l.b16 %v228
        %v277 = vunpack.c.l.b16 %v229
        %v278 = vunpack.c.l.b16 %v230
        %v279 = vunpack.c.l.b16 %v231
        %v280 = vunpack.c.l.b16 %v232
        %v281 = vunpack.c.l.b16 %v233
        %v282 = vunpack.c.l.b16 %v234
        %v283 = vunpack.c.l.b16 %v235
        %v284 = vunpack.c.l.b16 %v236
        %v285 = vunpack.c.l.b16 %v237
        %v286 = vunpack.c.l.b16 %v238
        %v287 = vpack.c.b16 %v272, %v271
        %v288 = vpack.c.b16 %v274, %v273
        %v289 = vpack.c.b16 %v276, %v275
        %v290 = vpack.c.b16 %v278, %v277
        %v291 = vpack.c.b16 %v280, %v279
        %v292 = vpack.c.b16 %v282, %v281
        %v293 = vpack.c.b16 %v284, %v283
        %v294 = vpack.c.b16 %v286, %v285
        %v319 = vunpack.c.l.b16 %v239
        %v320 = vunpack.c.l.b16 %v240
        %v321 = vunpack.c.l.b16 %v241
        %v322 = vunpack.c.l.b16 %v242
        %v323 = vunpack.c.l.b16 %v243
        %v324 = vunpack.c.l.b16 %v244
        %v325 = vunpack.c.l.b16 %v245
        %v326 = vunpack.c.l.b16 %v246
        %v327 = vunpack.c.l.b16 %v247
        %v328 = vunpack.c.l.b16 %v248
        %v329 = vunpack.c.l.b16 %v249
        %v330 = vunpack.c.l.b16 %v250
        %v331 = vunpack.c.l.b16 %v251
        %v332 = vunpack.c.l.b16 %v252
        %v333 = vunpack.c.l.b16 %v253
        %v334 = vunpack.c.l.b16 %v254
        %v335 = vpack.c.b16 %v320, %v319
        %v336 = vpack.c.b16 %v322, %v321
        %v337 = vpack.c.b16 %v324, %v323
        %v338 = vpack.c.b16 %v326, %v325
        %v339 = vpack.c.b16 %v328, %v327
        %v340 = vpack.c.b16 %v330, %v329
        %v341 = vpack.c.b16 %v332, %v331
        %v342 = vpack.c.b16 %v334, %v333
        %351 = vmatprep.subr.bf16.mxu0 0
        %352 = vmatpush1.bf16.msra.mxu0 %v335
        %353 = vmatprep.subr.bf16.mxu0 0
        %354 = vmatpush1.bf16.msra.mxu0 %v336
        %355 = vmatprep.subr.bf16.mxu0 0
        %356 = vmatpush1.bf16.msra.mxu0 %v337
        %357 = vmatprep.subr.bf16.mxu0 0
        %358 = vmatpush1.bf16.msra.mxu0 %v338
        %359 = vmatprep.subr.bf16.mxu0 0
        %360 = vmatpush1.bf16.msra.mxu0 %v339
        %361 = vmatprep.subr.bf16.mxu0 0
        %362 = vmatpush1.bf16.msra.mxu0 %v340
        %363 = vmatprep.subr.bf16.mxu0 0
        %364 = vmatpush1.bf16.msra.mxu0 %v341
        %365 = vmatprep.subr.bf16.mxu0 0
        %366 = vmatpush1.bf16.msra.mxu0 %v342
        %367 = vmatprep.subr.bf16.mxu0 0
        %368 = vmatpush1.bf16.msra.mxu0 0
        %369 = vmatprep.subr.bf16.mxu0 0
        %370 = vmatpush1.bf16.msra.mxu0 0
        %371 = vmatprep.subr.bf16.mxu0 0
        %372 = vmatpush1.bf16.msra.mxu0 0
        %373 = vmatprep.subr.bf16.mxu0 0
        %374 = vmatpush1.bf16.msra.mxu0 0
        %375 = vmatprep.subr.bf16.mxu0 0
        %376 = vmatpush1.bf16.msra.mxu0 0
        %377 = vmatprep.subr.bf16.mxu0 0
        %378 = vmatpush1.bf16.msra.mxu0 0
        %379 = vmatprep.subr.bf16.mxu0 0
        %380 = vmatpush1.bf16.msra.mxu0 0
        %381 = vmatprep.subr.bf16.mxu0 0
        %382 = vmatpush1.bf16.msra.mxu0 0
        %383 = vmatprep.mubr.bf16.mxu0 0
        %384 = vmatmul.mubr.bf16.gmra.mrb[0].mxu0 %v287
        %v385 = vpop.f32.mrb[0].mxu0
        %v386 = vadd.f32 0.0, %v385
        %v387 = vpop.f32.mrb[0].mxu0
        %v388 = vpop.f32.mrb[0].mxu0
        %v389 = vadd.f32 0.0, %v388
        %v390 = vpop.f32.mrb[0].mxu0
        %391 = vmatprep.mubr.bf16.mxu0 0
        %392 = vmatmul.mubr.bf16.gmra.mrb[0].mxu0 %v288
        %v393 = vpop.f32.mrb[0].mxu0
        %v394 = vadd.f32 0.0, %v393
        %v395 = vpop.f32.mrb[0].mxu0
        %v396 = vpop.f32.mrb[0].mxu0
        %v397 = vadd.f32 0.0, %v396
        %v398 = vpop.f32.mrb[0].mxu0
        %399 = vmatprep.mubr.bf16.mxu0 0
        %400 = vmatmul.mubr.bf16.gmra.mrb[0].mxu0 %v289
        %v401 = vpop.f32.mrb[0].mxu0
        %v402 = vadd.f32 0.0, %v401
        %v403 = vpop.f32.mrb[0].mxu0
        %v404 = vpop.f32.mrb[0].mxu0
        %v405 = vadd.f32 0.0, %v404
        %v406 = vpop.f32.mrb[0].mxu0
        %407 = vmatprep.mubr.bf16.mxu0 0
        %408 = vmatmul.mubr.bf16.gmra.mrb[0].mxu0 %v290
        %v409 = vpop.f32.mrb[0].mxu0
        %v410 = vadd.f32 0.0, %v409
        %v411 = vpop.f32.mrb[0].mxu0
        %v412 = vpop.f32.mrb[0].mxu0
        %v413 = vadd.f32 0.0, %v412
        %v414 = vpop.f32.mrb[0].mxu0
        %415 = vmatprep.mubr.bf16.mxu0 0
        %416 = vmatmul.mubr.bf16.gmra.mrb[0].mxu0 %v291
        %v417 = vpop.f32.mrb[0].mxu0
        %v418 = vadd.f32 0.0, %v417
        %v419 = vpop.f32.mrb[0].mxu0
        %v420 = vpop.f32.mrb[0].mxu0
        %v421 = vadd.f32 0.0, %v420
        %v422 = vpop.f32.mrb[0].mxu0
        %423 = vmatprep.mubr.bf16.mxu0 0
        %424 = vmatmul.mubr.bf16.gmra.mrb[0].mxu0 %v292
        %v425 = vpop.f32.mrb[0].mxu0
        %v426 = vadd.f32 0.0, %v425
        %v427 = vpop.f32.mrb[0].mxu0
        %v428 = vpop.f32.mrb[0].mxu0
        %v429 = vadd.f32 0.0, %v428
        %v430 = vpop.f32.mrb[0].mxu0
        %431 = vmatprep.mubr.bf16.mxu0 0
        %432 = vmatmul.mubr.bf16.gmra.mrb[0].mxu0 %v293
        %v433 = vpop.f32.mrb[0].mxu0
        %v434 = vadd.f32 0.0, %v433
        %v435 = vpop.f32.mrb[0].mxu0
        %v436 = vpop.f32.mrb[0].mxu0
        %v437 = vadd.f32 0.0, %v436
        %v438 = vpop.f32.mrb[0].mxu0
        %439 = vmatprep.mubr.bf16.mxu0 0
        %440 = vmatmul.mubr.bf16.gmra.mrb[0].mxu0 %v294
        %v441 = vpop.f32.mrb[0].mxu0
        %v442 = vadd.f32 0.0, %v441
        %v443 = vpop.f32.mrb[0].mxu0
        %v444 = vpop.f32.mrb[0].mxu0
        %v445 = vadd.f32 0.0, %v444
        %v446 = vpop.f32.mrb[0].mxu0
        %447 = vdwg.mxu0
        %v448 = vpack.c.bf16 %v389, %v386
        %v449 = vpack.c.bf16 %v397, %v394
        %v450 = vpack.c.bf16 %v405, %v402
        %v451 = vpack.c.bf16 %v413, %v410
        %v452 = vpack.c.bf16 %v421, %v418
        %v453 = vpack.c.bf16 %v429, %v426
        %v454 = vpack.c.bf16 %v437, %v434
        %v455 = vpack.c.bf16 %v445, %v442
        %v464 = vunpack.c.l.b16 %v448
        %v465 = vunpack.c.h.b16 %v448
        %v466 = vunpack.c.l.b16 %v449
        %v467 = vunpack.c.h.b16 %v449
        %v468 = vunpack.c.l.b16 %v450
        %v469 = vunpack.c.h.b16 %v450
        %v470 = vunpack.c.l.b16 %v451
        %v471 = vunpack.c.h.b16 %v451
        %v472 = vunpack.c.l.b16 %v452
        %v473 = vunpack.c.h.b16 %v452
        %v474 = vunpack.c.l.b16 %v453
        %v475 = vunpack.c.h.b16 %v453
        %v476 = vunpack.c.l.b16 %v454
        %v477 = vunpack.c.h.b16 %v454
        %v478 = vunpack.c.l.b16 %v455
        %v479 = vunpack.c.h.b16 %v455
        %v480 = vpack.c.b16 %v464, %v464
        %v481 = vpack.c.b16 %v465, %v465
        %v482 = vpack.c.b16 %v466, %v466
        %v483 = vpack.c.b16 %v467, %v467
        %v484 = vpack.c.b16 %v468, %v468
        %v485 = vpack.c.b16 %v469, %v469
        %v486 = vpack.c.b16 %v470, %v470
        %v487 = vpack.c.b16 %v471, %v471
        %v488 = vpack.c.b16 %v472, %v472
        %v489 = vpack.c.b16 %v473, %v473
        %v490 = vpack.c.b16 %v474, %v474
        %v491 = vpack.c.b16 %v475, %v475
        %v492 = vpack.c.b16 %v476, %v476
        %v493 = vpack.c.b16 %v477, %v477
        %v494 = vpack.c.b16 %v478, %v478
        %v495 = vpack.c.b16 %v479, %v479
        %512 = vst [vmem:[%s219] sm:$0xf] %v480
        %513 = vst [vmem:[%s219 + $0x4] sm:$0xf] %v481
        %514 = vst [vmem:[%s219 + $0x8] sm:$0xf] %v482
        %515 = vst [vmem:[%s219 + $0xc] sm:$0xf] %v483
        %516 = vst [vmem:[%s219 + $0x10] sm:$0xf] %v484
        %517 = vst [vmem:[%s219 + $0x14] sm:$0xf] %v485
        %518 = vst [vmem:[%s219 + $0x18] sm:$0xf] %v486
        %519 = vst [vmem:[%s219 + $0x1c] sm:$0xf] %v487
        %520 = vst [vmem:[%s219 + $0x20] sm:$0xf] %v488
        %521 = vst [vmem:[%s219 + $0x24] sm:$0xf] %v489
        %522 = vst [vmem:[%s219 + $0x28] sm:$0xf] %v490
        %523 = vst [vmem:[%s219 + $0x2c] sm:$0xf] %v491
        %524 = vst [vmem:[%s219 + $0x30] sm:$0xf] %v492
        %525 = vst [vmem:[%s219 + $0x34] sm:$0xf] %v493
        %526 = vst [vmem:[%s219 + $0x38] sm:$0xf] %v494
        %527 = vst [vmem:[%s219 + $0x3c] sm:$0xf] %v495
        %s528 = sand.u32 %s98, 1
        %s529 = scalar_lea.sflag [#allocation4], %s528
        %s530 = sand.u32 %s98, 1
        %s531 = smul.addr %s530, 64
        %s532 = scalar_lea.vmem [#allocation7], %s531
        // Predicated region
        $region37: #{tpu_custom_call.1} parent=27 // pred_check
          %p533 = pneg %p108
        $region38: #{tpu_custom_call.1} parent=27 // pred_check_branch
          %535 = sbr.rel (%p533) target = $region40
        $region39: #{tpu_custom_call.1} parent=27 // pred_region
          %s536 = smul.u32 16, %s27
          %s538 = ssub.s32 1024, 1024
          %539 = vsyncadd %s529, %s538
          %s540 = smul.addr %s26, 16
          %s541 = sadd.s32 %s536, %s540
          %s542 = smul.addr %s541, 64
          %s543 = scalar_lea.hbm %s2, %s542
          %s544 = sshll.u32 %s532, 4
          %s545 = int_to_ptr.vmem [resolvable:$true] %s544
          %550 = dma.vmem_to_hbm [thread:$0]  %s545, 1024, %s543, %s529, 64, 64, 4
        $region40: #{tpu_custom_call.1} parent=27 // pred_fallthru
          _
      $region28: #{tpu_custom_call.1} parent=5 // pred_fallthru
        _
      %p551 = scmp.le.s32.totalorder 2, %s17
      // Predicated region
      $region41: #{tpu_custom_call.1} parent=5 // pred_check
        %p552 = pneg %p551
      $region42: #{tpu_custom_call.1} parent=5 // pred_check_branch
        %554 = sbr.rel (%p552) target = $region44
      $region43: #{tpu_custom_call.1} parent=5 // pred_region
        %s555 = ssub.s32 %s17, 2
        // Predicated region
        $region45: #{tpu_custom_call.1} parent=43 // pred_check
          %p556 = pneg %p114
        $region46: #{tpu_custom_call.1} parent=43 // pred_check_branch
          %558 = sbr.rel (%p556) target = $region48
        $region47: #{tpu_custom_call.1} parent=43 // pred_region
          %s559 = sand.u32 %s99, 1
          %s560 = scalar_lea.sflag [#allocation4], %s559
          %s561 = sand.u32 %s99, 1
          %s562 = smul.addr %s561, 64
          %s563 = scalar_lea.vmem [#allocation7], %s562
          %564 = dma.done %s560, 1024
        $region48: #{tpu_custom_call.1} parent=43 // pred_fallthru
          _
      $region44: #{tpu_custom_call.1} parent=5 // pred_fallthru
        _
    $region6: #{tpu_custom_call.1} parent=1 // loop_footer
      %s21 = sadd.s32 1, %s17
    $region7: #{tpu_custom_call.1} parent=1 // loop_footer_branch
      %16 = sbr.rel target = $region3
    $region8: #{tpu_custom_call.1} parent=1 // loop_exit
      _
    %565 = vsyncpa [#allocation3], 1
    %s566 = scalar_lea.sflag [#allocation3], 1
    %567 = vsyncpa %s566, 1
    %568 = vsyncpa [#allocation6], 1
    %s569 = scalar_lea.sflag [#allocation6], 1
    %570 = vsyncpa %s569, 1
    %571 = vsyncpa [#allocation4], 1
    %s572 = scalar_lea.sflag [#allocation4], 1
    %573 = vsyncpa %s572, 1

</llo_original>
